<compile_context>
chip_gen: v7x
topology: tpu7x:2x2x1
jax: 0.10.0
libtpu: 0.0.40
codegen_flags: <defaults>
</compile_context>

<pallas_src>
import functools

import jax
import jax.numpy as jnp
from jax.experimental import pallas as pl
from jax.experimental.pallas import tpu as pltpu

CLAMP_MIN = 1e-12
CLAMP_MAX = 1e12


# ---------------- Pallas kernel ----------------

def _center_loss_kernel(labels_sm, x_ref, centers_hbm, o_ref, cbuf, sem, *,
                        block_b, batch, num_classes, inv_batch):
    # labels_sm:   (Bp,) int32 in SMEM (scalar prefetch)
    # x_ref:       (TB, Dp) f32 VMEM tile (auto-pipelined)
    # centers_hbm: (C, Dp) f32 raw HBM ref (memory_space=pl.ANY)
    # o_ref:       (1, 8, 128) f32 per-tile partial-sum block (unique per step)
    # cbuf:        (TB, Dp) f32 VMEM gather buffer
    # sem:         scalar DMA semaphore shared by the row copies
    base = pl.program_id(0) * block_b

    # Gather the TB labelled center rows: centers[labels[base + r]] -> cbuf[r].
    @pl.loop(0, block_b)
    def _issue(r):
        lab = jnp.clip(labels_sm[base + r], 0, num_classes - 1)
        pltpu.make_async_copy(centers_hbm.at[lab], cbuf.at[r], sem).start()

    @pl.loop(0, block_b)
    def _wait(r):
        # Same-size descriptor; src index is irrelevant for the wait.
        pltpu.make_async_copy(centers_hbm.at[0], cbuf.at[r], sem).wait()

    diff = x_ref[...] - cbuf[...]
    dist = jnp.sum(diff * diff, axis=1, keepdims=True)          # (TB, 1) XLU reduce
    dist = jnp.clip(dist, CLAMP_MIN, CLAMP_MAX)                 # clamp on (TB, 1) only

    # Re-mask padded batch rows AFTER the clamp (else they'd contribute >= 1e-12).
    row = base + jax.lax.broadcasted_iota(jnp.int32, dist.shape, 0)
    dist = jnp.where(row < batch, dist, 0.0)

    partial = jnp.sum(dist) * inv_batch
    o_ref[...] = jnp.broadcast_to(partial, o_ref.shape).astype(o_ref.dtype)


# ---------------- wrapper ----------------

def _round_up(v, m):
    return ((v + m - 1) // m) * m


def _pad_2d(a, rows, cols):
    r, c = a.shape
    if (r, c) == (rows, cols):          # skip the extra HBM pass when already aligned
        return a
    return jnp.zeros((rows, cols), a.dtype).at[:r, :c].set(a)


def center_loss(x, labels, centers, *, block_b=256):
    """x: (B, D) f32, labels: (B,) int, centers: (C, D) f32 -> scalar loss."""
    B, D = x.shape
    C, Dc = centers.shape
    assert D == Dc

    Dp = _round_up(D, 128)                        # lane-dense feature dim
    TB = max(8, _round_up(min(block_b, B), 8))    # sublane-aligned batch tile
    Bp = _round_up(B, TB)
    num_tiles = Bp // TB

    x_p = _pad_2d(x.astype(jnp.float32), Bp, Dp)
    c_p = _pad_2d(centers.astype(jnp.float32), C, Dp)   # pad feature dim only
    labels_i32 = labels.astype(jnp.int32)
    labels_p = (labels_i32 if Bp == B
                else jnp.zeros((Bp,), jnp.int32).at[:B].set(labels_i32))

    kernel = functools.partial(
        _center_loss_kernel,
        block_b=TB, batch=B, num_classes=C, inv_batch=1.0 / B)

    out = pl.pallas_call(
        kernel,
        out_shape=jax.ShapeDtypeStruct((num_tiles, 8, 128), jnp.float32),
        grid_spec=pltpu.PrefetchScalarGridSpec(
            num_scalar_prefetch=1,                       # labels -> SMEM
            grid=(num_tiles,),
            in_specs=[
                pl.BlockSpec((TB, Dp), lambda i, lab: (i, 0)),   # x tile (pipelined)
                pl.BlockSpec(memory_space=pl.ANY),               # centers stay in HBM
            ],
            out_specs=pl.BlockSpec((1, 8, 128), lambda i, lab: (i, 0, 0)),
            scratch_shapes=[
                pltpu.VMEM((TB, Dp), jnp.float32),       # gathered center rows
                pltpu.SemaphoreType.DMA(()),             # shared row-copy semaphore
            ],
        ),
        compiler_params=pltpu.CompilerParams(
            # No carried accumulator -> batch axis is truly parallel (megacore on v7x).
            dimension_semantics=("parallel",),
        ),
        cost_estimate=pl.CostEstimate(
            flops=3 * Bp * Dp + 4 * Bp,
            transcendentals=0,
            bytes_accessed=4 * (Bp * Dp          # x
                                + Bp * Dp        # gathered center rows
                                + Bp             # labels
                                + num_tiles * 8 * 128),
        ),
    )(labels_p, x_p, c_p)

    return jnp.sum(out[:, 0, 0])


# ---------------- reference (plain JAX, mirrors PyTorch semantics) ----------------

def _ref_center_loss(x, labels, centers):
    b = x.shape[0]
    distmat = (jnp.sum(x ** 2, axis=1, keepdims=True)
               + jnp.sum(centers ** 2, axis=1)[None, :]
               - 2.0 * x @ centers.T)
    sel = distmat[jnp.arange(b), labels]
    sel = jnp.clip(sel, CLAMP_MIN, CLAMP_MAX)
    return sel.mean()


if __name__ == "__main__":
    key = jax.random.PRNGKey(0)
    k_x, k_c, k_l = jax.random.split(key, 3)

    num_classes, feat_dim, batch = 10, 64, 16
    x = jax.random.normal(k_x, (batch, feat_dim), jnp.float32)
    centers = jax.random.normal(k_c, (num_classes, feat_dim), jnp.float32)
    labels = jax.random.randint(k_l, (batch,), 0, num_classes, dtype=jnp.int32)

    # block_b=8 -> 2 grid steps, exercising the per-tile partial-sum path.
    loss = jax.block_until_ready(center_loss(x, labels, centers, block_b=8))
    ref = jax.block_until_ready(_ref_center_loss(x, labels, centers))

    assert jnp.isfinite(loss)
    assert jnp.allclose(loss, ref, rtol=2e-3, atol=1e-3), (float(loss), float(ref))
    print("KERNEL_OK")
</pallas_src>

<mosaic_0001>
module attributes {stable_mosaic.version = 11 : i64} {
  func.func @_center_loss_kernel(%arg0: i32, %arg1: memref<16xi32, #tpu.memory_space<smem>>, %arg2: memref<8x128xf32, #tpu.memory_space<vmem>>, %arg3: memref<10x128xf32, #tpu.memory_space<any>>, %arg4: memref<1x8x128xf32, #tpu.memory_space<vmem>>, %arg5: memref<8x128xf32, #tpu.memory_space<vmem>>, %arg6: memref<!tpu.dma_semaphore, #tpu.memory_space<semaphore_mem>>) attributes {dimension_semantics = [#tpu.dimension_semantics<parallel>], iteration_bounds = array<i64: 2>, scalar_prefetch = 1 : i64, scratch_operands = 2 : i64, tpu.core_type = #tpu.core_type<tc>, window_params = [{transform_indices = @transform_0, window_bounds = array<i64: 8, 128>}, {}, {transform_indices = @transform_2, window_bounds = array<i64: 1, 8, 128>}]} {
    %c8_i32 = arith.constant 8 : i32
    %0 = arith.muli %arg0, %c8_i32 : i32
    %c0_i32 = arith.constant 0 : i32
    %c8_i32_0 = arith.constant 8 : i32
    %1 = arith.addi %c0_i32, %c8_i32_0 : i32
    %c1_i32 = arith.constant 1 : i32
    scf.for %arg7 = %c0_i32 to %1 step %c1_i32  : i32 {
      %c1_i32_17 = arith.constant 1 : i32
      %27 = arith.muli %arg7, %c1_i32_17 : i32
      %c0_i32_18 = arith.constant 0 : i32
      %28 = arith.addi %c0_i32_18, %27 : i32
      %29 = arith.addi %0, %28 : i32
      %30 = arith.index_cast %29 : i32 to index
      %31 = memref.load %arg1[%30] : memref<16xi32, #tpu.memory_space<smem>>
      %c0_i32_19 = arith.constant 0 : i32
      %c9_i32 = arith.constant 9 : i32
      %32 = arith.maxsi %c0_i32_19, %31 : i32
      %33 = arith.minsi %c9_i32, %32 : i32
      %c0_i32_20 = arith.constant 0 : i32
      %34 = tpu.memref_slice %arg3[%33, %c0_i32_20] : memref<10x128xf32, #tpu.memory_space<any>> -> memref<1x128xf32, #tpu.memory_space<any>>
      %35 = tpu.memref_squeeze %34 : memref<1x128xf32, #tpu.memory_space<any>> -> memref<128xf32, #tpu.memory_space<any>>
      %c0_i32_21 = arith.constant 0 : i32
      %36 = tpu.memref_slice %arg5[%28, %c0_i32_21] : memref<8x128xf32, #tpu.memory_space<vmem>> -> memref<1x128xf32, #tpu.memory_space<vmem>>
      %37 = tpu.memref_squeeze %36 : memref<1x128xf32, #tpu.memory_space<vmem>> -> memref<128xf32, #tpu.memory_space<vmem>>
      tpu.enqueue_dma source(%35 : memref<128xf32, #tpu.memory_space<any>>) target(%37 : memref<128xf32, #tpu.memory_space<vmem>>) target_semaphore(%arg6 : memref<!tpu.dma_semaphore, #tpu.memory_space<semaphore_mem>>)
    }
    %c8_i32_1 = arith.constant 8 : i32
    %c0_i32_2 = arith.constant 0 : i32
    %c8_i32_3 = arith.constant 8 : i32
    %2 = arith.addi %c0_i32_2, %c8_i32_3 : i32
    %c1_i32_4 = arith.constant 1 : i32
    scf.for %arg7 = %c0_i32_2 to %2 step %c1_i32_4  : i32 {
      %c1_i32_17 = arith.constant 1 : i32
      %27 = arith.muli %arg7, %c1_i32_17 : i32
      %c0_i32_18 = arith.constant 0 : i32
      %28 = arith.addi %c0_i32_18, %27 : i32
      %c0_i32_19 = arith.constant 0 : i32
      %c0_i32_20 = arith.constant 0 : i32
      %29 = tpu.memref_slice %arg3[%c0_i32_19, %c0_i32_20] : memref<10x128xf32, #tpu.memory_space<any>> -> memref<1x128xf32, #tpu.memory_space<any>>
      %30 = tpu.memref_squeeze %29 : memref<1x128xf32, #tpu.memory_space<any>> -> memref<128xf32, #tpu.memory_space<any>>
      %c0_i32_21 = arith.constant 0 : i32
      %31 = tpu.memref_slice %arg5[%28, %c0_i32_21] : memref<8x128xf32, #tpu.memory_space<vmem>> -> memref<1x128xf32, #tpu.memory_space<vmem>>
      %32 = tpu.memref_squeeze %31 : memref<1x128xf32, #tpu.memory_space<vmem>> -> memref<128xf32, #tpu.memory_space<vmem>>
      tpu.wait_dma2 semaphore(%arg6 : memref<!tpu.dma_semaphore, #tpu.memory_space<semaphore_mem>>) src(%30 : memref<128xf32, #tpu.memory_space<any>>) dst(%32 : memref<128xf32, #tpu.memory_space<vmem>>)
    }
    %c8_i32_5 = arith.constant 8 : i32
    %c0 = arith.constant 0 : index
    %c0_6 = arith.constant 0 : index
    %3 = vector.load %arg2[%c0, %c0_6] : memref<8x128xf32, #tpu.memory_space<vmem>>, vector<8x128xf32>
    %c0_7 = arith.constant 0 : index
    %c0_8 = arith.constant 0 : index
    %4 = vector.load %arg5[%c0_7, %c0_8] : memref<8x128xf32, #tpu.memory_space<vmem>>, vector<8x128xf32>
    %5 = arith.subf %3, %4 : vector<8x128xf32>
    %6 = arith.mulf %5, %5 : vector<8x128xf32>
    %cst = arith.constant dense<0.000000e+00> : vector<8xf32>
    %7 = vector.multi_reduction <add>, %6, %cst [1] : vector<8x128xf32> to vector<8xf32>
    %8 = vector.shape_cast %7 : vector<8xf32> to vector<8x1xf32>
    %cst_9 = arith.constant 9.99999996E-13 : f32
    %cst_10 = arith.constant 9.99999995E+11 : f32
    %9 = vector.broadcast %cst_9 : f32 to vector<8x1xf32>
    %10 = arith.maximumf %9, %8 : vector<8x1xf32>
    %11 = vector.broadcast %cst_10 : f32 to vector<8x1xf32>
    %12 = arith.minimumf %11, %10 : vector<8x1xf32>
    %13 = tpu.iota {dimensions = array<i32: 0>} : vector<8x1xi32>
    %14 = vector.broadcast %0 : i32 to vector<8x1xi32>
    %15 = arith.addi %14, %13 : vector<8x1xi32>
    %c16_i32 = arith.constant 16 : i32
    %16 = vector.broadcast %c16_i32 : i32 to vector<8x1xi32>
    %17 = arith.cmpi slt, %15, %16 : vector<8x1xi32>
    %cst_11 = arith.constant 0.000000e+00 : f32
    %18 = vector.broadcast %cst_11 : f32 to vector<8x1xf32>
    %19 = arith.select %17, %12, %18 : vector<8x1xi1>, vector<8x1xf32>
    %20 = vector.shape_cast %19 : vector<8x1xf32> to vector<1x8x1xf32>
    %cst_12 = arith.constant dense<0.000000e+00> : vector<1xf32>
    %21 = vector.multi_reduction <add>, %20, %cst_12 [1, 2] : vector<1x8x1xf32> to vector<1xf32>
    %22 = vector.shape_cast %21 : vector<1xf32> to vector<1x1x1xf32>
    %23 = vector.extract %22[0, 0, 0] : f32 from vector<1x1x1xf32>
    %cst_13 = arith.constant 6.250000e-02 : f32
    %24 = arith.mulf %23, %cst_13 : f32
    %25 = vector.broadcast %24 : f32 to vector<1x8x128xf32>
    %c0_14 = arith.constant 0 : index
    %c0_15 = arith.constant 0 : index
    %c0_16 = arith.constant 0 : index
    %26 = vector.load %arg4[%c0_14, %c0_15, %c0_16] : memref<1x8x128xf32, #tpu.memory_space<vmem>>, vector<1x8x128xf32>
    tpu.vector_store %arg4[%c0_14, %c0_15, %c0_16], %25 {strides = array<i32>} : memref<1x8x128xf32, #tpu.memory_space<vmem>>, vector<1x8x128xf32>,
    return
  }
  func.func @transform_0(%arg0: i32, %arg1: memref<16xi32, #tpu.memory_space<smem>>) -> (i32, i32) {
    %c0_i32 = arith.constant 0 : i32
    %c0_i32_0 = arith.constant 0 : i32
    return %arg0, %c0_i32 : i32, i32
  }
  func.func @transform_2(%arg0: i32, %arg1: memref<16xi32, #tpu.memory_space<smem>>) -> (i32, i32, i32) {
    %c0_i32 = arith.constant 0 : i32
    %c0_i32_0 = arith.constant 0 : i32
    %c0_i32_1 = arith.constant 0 : i32
    return %arg0, %c0_i32, %c0_i32_0 : i32, i32, i32
  }
}

</mosaic_0001>

<llo_original>
// kernel: tpu_custom_call.1
$region0: #{tpu_custom_call.1}
  #allocation0 [shape = 'u32[]', space=smem, size = 0x4, offset = 0x4, fixed_abs, tag = 'smem constant byte address 0x4 - core index']
  #allocation1 [shape = 'u32[144,128]{1,0:T(1,128)}', space=vmem, size = 0x12000, scoped, tag = 'internal scratch']
  #allocation2 [shape = 'f32[8,128]{1,0:T(8,128)}', space=vmem, size = 0x1000, scoped, tag = 'scratch operand']
  #allocation3 [shape = 's32[1]{0}', space=sflag, size = 0x4, scoped, tag = 'scratch operand']
  #allocation4 [shape = 's32[1]{0}', space=sflag, size = 0x4, scoped, tag = 'scoped memory for tpu_custom_call.1']
  #allocation5 [shape = 'u8[512]{0}', space=smem, size = 0x200, scoped, tag = 'prefetched SMEM operand 0']
  #allocation10 [shape = 's32[]', space=sflag, size = 0x4, offset = 0, fixed_abs, tag = 'sflag constant byte address 0x0 - dummy sync flag']
  #allocation11 [shape = 's32[]', space=sflag, size = 0x4, offset = 0, fixed_abs, tag = 'sflag constant byte address 0x0 - dummy sync flag']
  #allocation12 [shape = 'u32[]', space=smem, size = 0x4, offset = 0x44, fixed_abs, tag = 'smem constant byte address 0x44 - assertion arg 0']
  #allocation13 [shape = 'u32[]', space=smem, size = 0x4, offset = 0x48, fixed_abs, tag = 'smem constant byte address 0x48 - assertion arg 1']
  %s0 = inlined_call_operand.hbm [shape: s32[16], index: 0, kind: input, shape index: {}]
  %s1 = inlined_call_operand.hbm [shape: f32[16,128], index: 1, kind: input, shape index: {}]
  %s2 = inlined_call_operand.hbm [shape: f32[10,128], index: 2, kind: input, shape index: {}]
  %s3 = inlined_call_operand.hbm [shape: f32[2,8,128], index: 3, kind: output, shape index: {}]
  %s4 = sld [smem:[#allocation0]]
  $region59: #{tpu_custom_call.1} parent=0
    _
  %s6 = ssub.s32 1, %s4
  %s7 = scalar_select 0, %s6, %s4
  %9 = dma.hbm_to_smem %s0, 16, [#allocation5], [#allocation4]
  %10 = dma.done [#allocation4], 16
  %11 = sfence
  $region1: #{tpu_custom_call.1} parent=0
    #allocation6 [shape = 'u8[8192]{0}', space=vmem, size = 0x2000, scoped, tag = 'input window, operand 1']
    #allocation7 [shape = 's32[2]{0}', space=sflag, size = 0x8, scoped, tag = 'scoped memory for tpu_custom_call.1']
    #allocation8 [shape = 's32[2]{0}', space=sflag, size = 0x8, scoped, tag = 'scoped memory for tpu_custom_call.1']
    #allocation9 [shape = 'u8[8192]{0}', space=vmem, size = 0x2000, scoped, tag = 'output window, operand 0']
    %12 = vsyncpa [#allocation7], 0
    %s13 = scalar_lea.sflag [#allocation7], 1
    %14 = vsyncpa %s13, 0
    %15 = vsyncpa [#allocation8], 0
    %s16 = scalar_lea.sflag [#allocation8], 1
    %17 = vsyncpa %s16, 0
    loop: start=0, step=1, limit=4
    $region2: #{tpu_custom_call.1} parent=1 // loop_pre_header
      _
    $region3: #{tpu_custom_call.1} parent=1 // loop_header
      %s19 = sphi 0, %s23
      %p20 = scmp.ge.s32.totalorder %s19, 4
      %s29 = sphi 0, %s31
      %s32 = sphi 0, %s29
      %s33 = sphi 0, %s32
      %s49 = sphi 0, %s33
      %s55 = sphi 0, %s57
      %s58 = sphi 0, %s55
      %s59 = sphi 0, %s58
      %s75 = sphi 0, %s59
    $region4: #{tpu_custom_call.1} parent=1 // loop_header_branch
      %22 = sbr.rel (%p20) target = $region8
    $region5: #{tpu_custom_call.1} parent=1 // loop_body
      %s24 = ssub.s32 %s19, 1
      %s25 = ssub.s32 %s19, 2
      %s26 = sadd.s32 %s19, 1
      %s27 = ssub.s32 %s19, %s26
      %p28 = scmp.eq.s32.totalorder %s27, 0
      %s30 = sadd.s32 %s29, 1
      %s31 = scalar_select %p28, %s29, %s30
      %p34 = pneg %p28
      %p35 = scmp.eq.s32.totalorder %s19, 1
      %p36 = por %p34, %p35
      %p37 = scmp.ne.s32.totalorder %s29, %s32
      %p38 = scmp.eq.s32.totalorder %s19, 0
      %p39 = por %p37, %p38
      %p40 = scmp.ne.s32.totalorder %s29, %s32
      %p41 = scmp.eq.s32.totalorder %s24, 1
      %p42 = por %p40, %p41
      %p43 = scmp.ne.s32.totalorder %s32, %s33
      %p44 = scmp.eq.s32.totalorder %s24, 0
      %p45 = por %p43, %p44
      %p46 = scmp.ne.s32.totalorder %s32, %s33
      %p47 = scmp.eq.s32.totalorder %s25, 1
      %p48 = por %p46, %p47
      %p50 = scmp.ne.s32.totalorder %s33, %s49
      %p51 = scmp.eq.s32.totalorder %s25, 0
      %p52 = por %p50, %p51
      %s53 = ssub.s32 %s19, %s26
      %p54 = scmp.eq.s32.totalorder %s53, 0
      %s56 = sadd.s32 %s55, 1
      %s57 = scalar_select %p54, %s55, %s56
      %p60 = pneg %p54
      %p61 = scmp.eq.s32.totalorder %s19, 1
      %p62 = por %p60, %p61
      %p63 = scmp.ne.s32.totalorder %s55, %s58
      %p64 = scmp.eq.s32.totalorder %s19, 0
      %p65 = por %p63, %p64
      %p66 = scmp.ne.s32.totalorder %s55, %s58
      %p67 = scmp.eq.s32.totalorder %s24, 1
      %p68 = por %p66, %p67
      %p69 = scmp.ne.s32.totalorder %s58, %s59
      %p70 = scmp.eq.s32.totalorder %s24, 0
      %p71 = por %p69, %p70
      %p72 = scmp.ne.s32.totalorder %s58, %s59
      %p73 = scmp.eq.s32.totalorder %s25, 1
      %p74 = por %p72, %p73
      %p76 = scmp.ne.s32.totalorder %s59, %s75
      %p77 = scmp.eq.s32.totalorder %s25, 0
      %p78 = por %p76, %p77
      %p79 = scmp.le.s32.totalorder 1, %s19
      %p80 = scmp.lt.s32.totalorder %s19, 3
      %p81 = pnand %p79, %p80
      %p82 = pneg %p81
      // Predicated region
      $region9: #{tpu_custom_call.1} parent=5 // pred_check
        _
      $region10: #{tpu_custom_call.1} parent=5 // pred_check_branch
        %84 = sbr.rel (%p81) target = $region12
      $region11: #{tpu_custom_call.1} parent=5 // pred_region
        %s85 = ssub.s32 %s19, 1
      $region12: #{tpu_custom_call.1} parent=5 // pred_fallthru
        _
      %p86 = scmp.lt.s32.totalorder %s19, 2
      // Predicated region
      $region13: #{tpu_custom_call.1} parent=5 // pred_check
        %p87 = pneg %p86
      $region14: #{tpu_custom_call.1} parent=5 // pred_check_branch
        %89 = sbr.rel (%p87) target = $region16
      $region15: #{tpu_custom_call.1} parent=5 // pred_region
        // Predicated region
        $region17: #{tpu_custom_call.1} parent=15 // pred_check
          %p90 = pneg %p39
        $region18: #{tpu_custom_call.1} parent=15 // pred_check_branch
          %92 = sbr.rel (%p90) target = $region20
        $region19: #{tpu_custom_call.1} parent=15 // pred_region
          %s93 = sand.u32 %s29, 1
          %s94 = scalar_lea.sflag [#allocation7], %s93
          %s95 = sand.u32 %s29, 1
          %s96 = smul.addr %s95, 8
          %s97 = scalar_lea.vmem [#allocation6], %s96
          %s99 = ssub.s32 128, 128
          %100 = vsyncadd %s94, %s99
          %s101 = smul.addr %s19, 128
          %s102 = scalar_lea.hbm %s1, %s101
          %s104 = sshll.u32 %s97, 4
          %s105 = int_to_ptr.vmem [resolvable:$true] %s104
          %107 = dma.hbm_to_vmem [thread:$0]  %s102, 128, %s105, %s94
        $region20: #{tpu_custom_call.1} parent=15 // pred_fallthru
          _
      $region16: #{tpu_custom_call.1} parent=5 // pred_fallthru
        _
      %p108 = scmp.le.s32.totalorder 1, %s19
      %p109 = scmp.lt.s32.totalorder %s19, 3
      %p110 = pnand %p108, %p109
      %p111 = pneg %p110
      // Predicated region
      $region21: #{tpu_custom_call.1} parent=5 // pred_check
        _
      $region22: #{tpu_custom_call.1} parent=5 // pred_check_branch
        %113 = sbr.rel (%p110) target = $region24
      $region23: #{tpu_custom_call.1} parent=5 // pred_region
        %s114 = ssub.s32 %s19, 1
        %s115 = sand.u32 %s32, 1
        %s116 = scalar_lea.sflag [#allocation7], %s115
        %s117 = sand.u32 %s32, 1
        %s118 = smul.addr %s117, 8
        %s119 = scalar_lea.vmem [#allocation6], %s118
        // Predicated region
        $region25: #{tpu_custom_call.1} parent=23 // pred_check
          %p120 = pneg %p45
        $region26: #{tpu_custom_call.1} parent=23 // pred_check_branch
          %122 = sbr.rel (%p120) target = $region28
        $region27: #{tpu_custom_call.1} parent=23 // pred_region
          %123 = dma.done %s116, 128
        $region28: #{tpu_custom_call.1} parent=23 // pred_fallthru
          _
        %s124 = sand.u32 %s32, 1
        %s125 = scalar_lea.sflag [#allocation7], %s124
        %s126 = sand.u32 %s32, 1
        %s127 = smul.addr %s126, 8
        %s128 = scalar_lea.vmem [#allocation6], %s127
        %p129 = pneg %p45
        %p130 = pneg %p42
        %p131 = pneg %p71
        %p132 = pneg %p68
        %s133 = sand.u32 %s58, 1
        %s134 = scalar_lea.sflag [#allocation8], %s133
        %s135 = sand.u32 %s58, 1
        %s136 = smul.addr %s135, 8
        %s137 = scalar_lea.vmem [#allocation9], %s136
        %s138 = smul.u32 %s24, 8
        loop: start=0, step=1, limit=8
        $region29: #{tpu_custom_call.1} parent=23 // loop_pre_header
          _
        $region30: #{tpu_custom_call.1} parent=23 // loop_header
          %s140 = sphi 0, %s144
          %p141 = scmp.ge.s32.totalorder %s140, 8
        $region31: #{tpu_custom_call.1} parent=23 // loop_header_branch
          %143 = sbr.rel (%p141) target = $region35
        $region32: #{tpu_custom_call.1} parent=23 // loop_body
          %s145 = sadd.s32 %s138, %s140
          %s146 = sld [smem:[#allocation5 + %s145]]
          %p147 = scmp.gt.s32.totalorder %s146, 0
          %s148 = scalar_select %p147, %s146, 0
          %p149 = scmp.lt.s32.totalorder %s148, 9
          %s150 = scalar_select %p149, %s148, 9
          %s151 = smul.addr %s150, 16
          %s152 = scalar_lea.hbm %s2, %s151
          %s153 = scalar_lea.vmem [#allocation2], %s140
          // Predicated region
          $region36: #{tpu_custom_call.1} parent=32 // pred_check
            _
          $region37: #{tpu_custom_call.1} parent=32 // pred_check_branch
            %155 = sbr.rel target = $region39
          $region38: #{tpu_custom_call.1} parent=32 // pred_region
            %156 = sst [smem:[#allocation12]] [#allocation11]
            %157 = sst [smem:[#allocation13]] [#allocation10]
          $region39: #{tpu_custom_call.1} parent=32 // pred_fallthru
            _
          %159 = shalt.err (0)
          %s161 = sshll.u32 %s153, 4
          %s162 = int_to_ptr.vmem [resolvable:$true] %s161
          %164 = dma.hbm_to_vmem [thread:$0]  %s152, 16, %s162, [#allocation3]
        $region33: #{tpu_custom_call.1} parent=23 // loop_footer
          %s144 = sadd.s32 1, %s140
        $region34: #{tpu_custom_call.1} parent=23 // loop_footer_branch
          %139 = sbr.rel target = $region30
        $region35: #{tpu_custom_call.1} parent=23 // loop_exit
          _
        loop: start=0, step=1, limit=8
        $region40: #{tpu_custom_call.1} parent=23 // loop_pre_header
          _
        $region41: #{tpu_custom_call.1} parent=23 // loop_header
          %s166 = sphi 0, %s170
          %p167 = scmp.ge.s32.totalorder %s166, 8
        $region42: #{tpu_custom_call.1} parent=23 // loop_header_branch
          %169 = sbr.rel (%p167) target = $region46
        $region43: #{tpu_custom_call.1} parent=23 // loop_body
          %172 = dma.done [#allocation3], 16
        $region44: #{tpu_custom_call.1} parent=23 // loop_footer
          %s170 = sadd.s32 1, %s166
        $region45: #{tpu_custom_call.1} parent=23 // loop_footer_branch
          %165 = sbr.rel target = $region41
        $region46: #{tpu_custom_call.1} parent=23 // loop_exit
          _
        %v173 = vld [vmem:[%s119] sm:$0xff]
        %v174 = vld [vmem:[#allocation2] sm:$0xff]
        %v175 = vsub.f32 %v173, %v174
        %v176 = vmul.f32 %v175, %v175
        %177 = vadd.xlane.f32.xlu0 %v176
        %v178 = vpop.xlane.xlu0 %177
        %v179 = vmax.f32 %v178, 1e-12
        %v180 = vmin.f32 %v179, 1e+12
        %v181 = vlaneseq
        %v182 = vshrl.u32 %v181, 7
        %v183 = vstv %s138
        %v184 = vadd.s32 %v183, %v182
        %vm185 = vcmp.lt.s32.totalorder %v184, 16
        %v186 = vsel %vm185, %v180, 0.0
        %vm187 = vcmask 7168
        %v188 = vsel %vm187, %v186, 0.0
        %189 = vadd.xlane.f32.xlu0 %v188
        %v190 = vpop.xlane.xlu0 %189
        %v191 = vrot.slane %v190, 4
        %v192 = vadd.f32 %v190, %v191
        %v193 = vrot.slane %v192, 2
        %v194 = vadd.f32 %v192, %v193
        %v195 = vrot.slane %v194, 1
        %v196 = vadd.f32 %v194, %v195
        %s197 = vtos %v196
        %s198 = smul.f32 %s197, 0.0625
        %v199 = vstv %s198
        %200 = vst [vmem:[%s137] sm:$0xff] %v199
        %s201 = sand.u32 %s58, 1
        %s202 = scalar_lea.sflag [#allocation8], %s201
        %s203 = sand.u32 %s58, 1
        %s204 = smul.addr %s203, 8
        %s205 = scalar_lea.vmem [#allocation9], %s204
        // Predicated region
        $region47: #{tpu_custom_call.1} parent=23 // pred_check
          %p206 = pneg %p68
        $region48: #{tpu_custom_call.1} parent=23 // pred_check_branch
          %208 = sbr.rel (%p206) target = $region50
        $region49: #{tpu_custom_call.1} parent=23 // pred_region
          %s210 = ssub.s32 128, 128
          %211 = vsyncadd %s202, %s210
          %s212 = smul.addr %s24, 128
          %s213 = scalar_lea.hbm %s3, %s212
          %s215 = sshll.u32 %s205, 4
          %s216 = int_to_ptr.vmem [resolvable:$true] %s215
          %218 = dma.vmem_to_hbm [thread:$0]  %s216, 128, %s213, %s202
        $region50: #{tpu_custom_call.1} parent=23 // pred_fallthru
          _
      $region24: #{tpu_custom_call.1} parent=5 // pred_fallthru
        _
      %p219 = scmp.le.s32.totalorder 2, %s19
      // Predicated region
      $region51: #{tpu_custom_call.1} parent=5 // pred_check
        %p220 = pneg %p219
      $region52: #{tpu_custom_call.1} parent=5 // pred_check_branch
        %222 = sbr.rel (%p220) target = $region54
      $region53: #{tpu_custom_call.1} parent=5 // pred_region
        %s223 = ssub.s32 %s19, 2
        // Predicated region
        $region55: #{tpu_custom_call.1} parent=53 // pred_check
          %p224 = pneg %p74
        $region56: #{tpu_custom_call.1} parent=53 // pred_check_branch
          %226 = sbr.rel (%p224) target = $region58
        $region57: #{tpu_custom_call.1} parent=53 // pred_region
          %s227 = sand.u32 %s59, 1
          %s228 = scalar_lea.sflag [#allocation8], %s227
          %s229 = sand.u32 %s59, 1
          %s230 = smul.addr %s229, 8
          %s231 = scalar_lea.vmem [#allocation9], %s230
          %232 = dma.done %s228, 128
        $region58: #{tpu_custom_call.1} parent=53 // pred_fallthru
          _
      $region54: #{tpu_custom_call.1} parent=5 // pred_fallthru
        _
    $region6: #{tpu_custom_call.1} parent=1 // loop_footer
      %s23 = sadd.s32 1, %s19
    $region7: #{tpu_custom_call.1} parent=1 // loop_footer_branch
      %18 = sbr.rel target = $region3
    $region8: #{tpu_custom_call.1} parent=1 // loop_exit
      _
    %233 = vsyncpa [#allocation7], 1
    %s234 = scalar_lea.sflag [#allocation7], 1
    %235 = vsyncpa %s234, 1
    %236 = vsyncpa [#allocation8], 1
    %s237 = scalar_lea.sflag [#allocation8], 1
    %238 = vsyncpa %s237, 1
  %239 = vsyncmov [#allocation3]
  %s240 = vpop.sfrf %239
  %p241 = scmp.eq.s32.totalorder %s240, 0
  %p242 = pneg %p241
  %244 = shalt.err (%p242)

</llo_original>
